<compile_context>
chip_gen: v7x
topology: tpu7x:2x2x1
jax: 0.10.0
libtpu: 0.0.40
codegen_flags: <defaults>
</compile_context>

<pallas_src>
import functools

import jax
import jax.numpy as jnp
from jax.experimental import pallas as pl
from jax.experimental.pallas import tpu as pltpu


def _linear_kernel(x_ref, w_ref, b_ref, o_ref):
    # Cast x to the weight dtype on the VPU (hidden under the input DMA),
    # MXU matmul with f32 accumulation, f32 bias add, cast on store.
    x = x_ref[...].astype(w_ref.dtype)
    acc = jnp.dot(x, w_ref[...], preferred_element_type=jnp.float32)
    o_ref[...] = (acc + b_ref[...]).astype(o_ref.dtype)


def _round_up(n, m):
    return ((n + m - 1) // m) * m


def confnet_prepare_params(weight, bias, *, param_dtype=jnp.bfloat16):
    """One-time param prep (hoisted out of the forward pass).

    weight: (annotators, dim) in PyTorch nn.Linear layout.
    bias:   (annotators,)
    Returns (w_t, b2d): w_t = weight.T as (dim, annotators) in `param_dtype`
    (bf16 by default; pass jnp.float32 for full-f32 fidelity) and b2d the bias
    reshaped to (1, annotators) in f32 (the bias add stays f32 on all chips).
    """
    w_t = jnp.asarray(weight).T.astype(param_dtype)
    b2d = jnp.asarray(bias, jnp.float32).reshape(1, -1)
    return w_t, b2d


@functools.partial(jax.jit, static_argnames=("tile_m", "out_dtype"))
def confnet_forward(x, w_t, b2d, *, tile_m=8192, out_dtype=None):
    """x: (B, dim); w_t: (dim, annotators) pre-transposed; b2d: (1, annotators) f32.

    Computes x @ W.T + b (PyTorch nn.Linear semantics).
    out_dtype defaults to x.dtype; pass jnp.bfloat16 to halve output HBM bytes.
    """
    B, dim = x.shape
    annotators = w_t.shape[1]
    out_dtype = jnp.dtype(out_dtype) if out_dtype is not None else x.dtype

    # Batch tile: as large as tile_m allows, but capped so large B gives at
    # least 2 grid steps (both v7x TensorCores engage); never below 8 rows.
    tm = max(8, min(tile_m, _round_up(pl.cdiv(B, 2), 8)))
    grid = (pl.cdiv(B, tm),)  # ragged last block handled by Pallas masking

    # VMEM budget: VMEM blocks are lane-padded to 128, so the output block
    # costs tm*128*bytes per buffer, not tm*21*bytes. Double-buffered x and
    # out blocks dominate; weights/bias are tiny and VMEM-resident.
    lane = 128
    x_bytes = jnp.dtype(x.dtype).itemsize
    o_bytes = jnp.dtype(out_dtype).itemsize
    w_bytes = jnp.dtype(w_t.dtype).itemsize
    vmem_bytes = (
        2 * tm * _round_up(dim, lane) * x_bytes
        + 2 * tm * _round_up(annotators, lane) * o_bytes
        + 2 * _round_up(dim, 8) * _round_up(annotators, lane) * w_bytes
        + (2 << 20)  # headroom for bias, scalars, compiler scratch
    )
    vmem_limit = int(min(vmem_bytes, 64 << 20))

    return pl.pallas_call(
        _linear_kernel,
        out_shape=jax.ShapeDtypeStruct((B, annotators), out_dtype),
        grid_spec=pl.GridSpec(
            grid=grid,
            in_specs=[
                # Stream x tiles along the batch axis, native dtype.
                pl.BlockSpec((tm, dim), lambda i: (i, 0)),
                # Weight & bias: constant block index -> VMEM-resident across
                # all grid steps (DMA'd once, never re-fetched).
                pl.BlockSpec((dim, annotators), lambda i: (0, 0)),
                pl.BlockSpec((1, annotators), lambda i: (0, 0)),
            ],
            out_specs=pl.BlockSpec((tm, annotators), lambda i: (i, 0)),
        ),
        compiler_params=pltpu.CompilerParams(
            # Independent batch tiles: sharded across v7x's 2 TensorCores.
            dimension_semantics=("parallel",),
            vmem_limit_bytes=vmem_limit,
        ),
    )(x, w_t, b2d)


if __name__ == "__main__":
    # Small shapes consistent with the module: ConfNet(dim=32, annotators=21).
    batch, dim, annotators = 8, 32, 21

    key = jax.random.PRNGKey(0)
    kx, kw, kb = jax.random.split(key, 3)

    # Deterministic synthetic parameters (PyTorch Linear layout: (out, in)).
    bound = 1.0 / (dim ** 0.5)
    weight = jax.random.uniform(kw, (annotators, dim), jnp.float32,
                                minval=-bound, maxval=bound)
    bias = jax.random.uniform(kb, (annotators,), jnp.float32,
                              minval=-bound, maxval=bound)

    x = jax.random.normal(kx, (batch, dim), jnp.float32)

    # Param prep hoisted out of the forward pass (pre-transpose + bias reshape).
    w_t, b2d = confnet_prepare_params(weight, bias, param_dtype=jnp.bfloat16)

    out = jax.block_until_ready(confnet_forward(x, w_t, b2d))

    # Reference 1: same bf16 quantization as the kernel's MXU path.
    ref_bf16 = (x.astype(jnp.bfloat16).astype(jnp.float32)
                @ w_t.astype(jnp.float32) + bias)
    # Reference 2: pure-f32 nn.Linear semantics (loose tolerance for bf16 path).
    ref_f32 = x @ weight.T + bias

    assert out.shape == (batch, annotators)
    assert jnp.allclose(out, ref_bf16, atol=1e-4, rtol=1e-4)
    assert jnp.allclose(out, ref_f32, atol=3e-2, rtol=3e-2)

    # Ragged-batch path (B not a multiple of the tile): masked last block.
    x2 = jax.random.normal(kx, (10, dim), jnp.float32)
    out2 = jax.block_until_ready(confnet_forward(x2, w_t, b2d))
    ref2 = x2 @ weight.T + bias
    assert out2.shape == (10, annotators)
    assert jnp.allclose(out2, ref2, atol=3e-2, rtol=3e-2)

    # Full-f32 fidelity path (f32 params) matches the f32 reference tightly.
    w_t32, b2d32 = confnet_prepare_params(weight, bias, param_dtype=jnp.float32)
    out3 = jax.block_until_ready(confnet_forward(x, w_t32, b2d32))
    assert jnp.allclose(out3, ref_f32, atol=1e-5, rtol=1e-5)

    # bf16 output option (halves the dominant HBM write stream).
    out4 = jax.block_until_ready(
        confnet_forward(x, w_t, b2d, out_dtype=jnp.bfloat16))
    assert out4.dtype == jnp.bfloat16 and out4.shape == (batch, annotators)

    print("KERNEL_OK")
</pallas_src>

<mosaic_0001>
module attributes {stable_mosaic.version = 11 : i64} {
  func.func @_linear_kernel(%arg0: i32, %arg1: memref<8x32xf32, #tpu.memory_space<vmem>>, %arg2: memref<32x21xbf16, #tpu.memory_space<vmem>>, %arg3: memref<1x21xf32, #tpu.memory_space<vmem>>, %arg4: memref<8x21xf32, #tpu.memory_space<vmem>>) attributes {dimension_semantics = [#tpu.dimension_semantics<parallel>], iteration_bounds = array<i64: 1>, scalar_prefetch = 0 : i64, scratch_operands = 0 : i64, tpu.core_type = #tpu.core_type<tc>, window_params = [{transform_indices = @transform_0, window_bounds = array<i64: 8, 32>}, {pipeline_mode = #tpu.pipeline_mode<synchronous>, transform_indices = @transform_1, window_bounds = array<i64: 32, 21>}, {pipeline_mode = #tpu.pipeline_mode<synchronous>, transform_indices = @transform_2, window_bounds = array<i64: 1, 21>}, {transform_indices = @transform_3, window_bounds = array<i64: 8, 21>}]} {
    %c0 = arith.constant 0 : index
    %c0_0 = arith.constant 0 : index
    %0 = vector.load %arg1[%c0, %c0_0] : memref<8x32xf32, #tpu.memory_space<vmem>>, vector<8x32xf32>
    %1 = arith.truncf %0 : vector<8x32xf32> to vector<8x32xbf16>
    %c0_1 = arith.constant 0 : index
    %c0_2 = arith.constant 0 : index
    %2 = vector.load %arg2[%c0_1, %c0_2] : memref<32x21xbf16, #tpu.memory_space<vmem>>, vector<32x21xbf16>
    %cst = arith.constant dense<0.000000e+00> : vector<8x21xf32>
    %3 = tpu.matmul %1, %2, %cst {dimension_numbers = #tpu.dot_dimension_numbers<[1], [0], [0], [1], [0, 0, 1, 1], [], []>} : vector<8x32xbf16>, vector<32x21xbf16>, vector<8x21xf32> -> vector<8x21xf32>
    %c0_3 = arith.constant 0 : index
    %c0_4 = arith.constant 0 : index
    %4 = vector.load %arg3[%c0_3, %c0_4] : memref<1x21xf32, #tpu.memory_space<vmem>>, vector<1x21xf32>
    %5 = vector.broadcast %4 : vector<1x21xf32> to vector<8x21xf32>
    %6 = arith.addf %3, %5 : vector<8x21xf32>
    %c0_5 = arith.constant 0 : index
    %c0_6 = arith.constant 0 : index
    %7 = vector.load %arg4[%c0_5, %c0_6] : memref<8x21xf32, #tpu.memory_space<vmem>>, vector<8x21xf32>
    tpu.vector_store %arg4[%c0_5, %c0_6], %6 {strides = array<i32>} : memref<8x21xf32, #tpu.memory_space<vmem>>, vector<8x21xf32>,
    return
  }
  func.func @transform_0(%arg0: i32) -> (i32, i32) {
    %c0_i32 = arith.constant 0 : i32
    %c0_i32_0 = arith.constant 0 : i32
    return %arg0, %c0_i32 : i32, i32
  }
  func.func @transform_1(%arg0: i32) -> (i32, i32) {
    %c0_i32 = arith.constant 0 : i32
    %c0_i32_0 = arith.constant 0 : i32
    %c0_i32_1 = arith.constant 0 : i32
    return %c0_i32, %c0_i32_0 : i32, i32
  }
  func.func @transform_2(%arg0: i32) -> (i32, i32) {
    %c0_i32 = arith.constant 0 : i32
    %c0_i32_0 = arith.constant 0 : i32
    %c0_i32_1 = arith.constant 0 : i32
    return %c0_i32, %c0_i32_0 : i32, i32
  }
  func.func @transform_3(%arg0: i32) -> (i32, i32) {
    %c0_i32 = arith.constant 0 : i32
    %c0_i32_0 = arith.constant 0 : i32
    return %arg0, %c0_i32 : i32, i32
  }
}

</mosaic_0001>

<llo_original>
// kernel: confnet_forward.1
$region0: #{confnet_forward.1}
  #allocation0 [shape = 'u32[]', space=smem, size = 0x4, offset = 0x4, fixed_abs, tag = 'smem constant byte address 0x4 - core index']
  #allocation1 [shape = 'u32[144,128]{1,0:T(1,128)}', space=vmem, size = 0x12000, scoped, tag = 'internal scratch']
  %s0 = inlined_call_operand.vmem [shape: f32[8,32], index: 0, kind: input, shape index: {}]
  %s1 = inlined_call_operand.vmem [shape: bf16[32,21], index: 1, kind: input, shape index: {}]
  %s2 = inlined_call_operand.vmem [shape: f32[1,21], index: 2, kind: input, shape index: {}]
  %s3 = inlined_call_operand.hbm [shape: f32[8,21], index: 3, kind: output, shape index: {}]
  %s4 = sld [smem:[#allocation0]]
  $region22: #{confnet_forward.1} parent=0
    _
  %s6 = ssub.s32 1, %s4
  %s7 = scalar_select 0, %s6, %s4
  $region1: #{confnet_forward.1} parent=0
    #allocation2 [shape = 'u8[4096]{0}', space=vmem, size = 0x1000, scoped, tag = 'output window, operand 0, single buffered']
    #allocation3 [shape = 's32[1]{0}', space=sflag, size = 0x4, scoped, tag = 'scoped memory for confnet_forward.1']
    %8 = vsyncpa [#allocation3], 0
    // Predicated region
    $region2: #{confnet_forward.1} parent=1 // pred_check
      _
    $region3: #{confnet_forward.1} parent=1 // pred_check_branch
      %10 = sbr.rel (0) target = $region5
    $region4: #{confnet_forward.1} parent=1 // pred_region
      _
    $region5: #{confnet_forward.1} parent=1 // pred_fallthru
      _
    // Predicated region
    $region6: #{confnet_forward.1} parent=1 // pred_check
      _
    $region7: #{confnet_forward.1} parent=1 // pred_check_branch
      %12 = sbr.rel (0) target = $region9
    $region8: #{confnet_forward.1} parent=1 // pred_region
      _
    $region9: #{confnet_forward.1} parent=1 // pred_fallthru
      _
    // Predicated region
    $region10: #{confnet_forward.1} parent=1 // pred_check
      _
    $region11: #{confnet_forward.1} parent=1 // pred_check_branch
      %14 = sbr.rel (0) target = $region13
    $region12: #{confnet_forward.1} parent=1 // pred_region
      _
    $region13: #{confnet_forward.1} parent=1 // pred_fallthru
      _
    %v16 = vld [vmem:[%s0] sm:$0xff]
    %v17 = vpack.c.bf16 %v16, %v16
    %v18 = vld [vmem:[%s1] sm:$0xf]
    %v19 = vld [vmem:[%s1 + $0x4] sm:$0xf]
    %v20 = vld [vmem:[%s1 + $0x8] sm:$0xf]
    %v21 = vld [vmem:[%s1 + $0xc] sm:$0xf]
    %v22 = vld [vmem:[%s2] sm:$0x1]
    %v24 = vlaneseq
    %v25 = vshrl.u32 %v24, 7
    %v26 = vsub.s32 0, %v25
    %v27 = vrot.slane %v22, %v26
    %v33 = vunpack.c.l.b16 %v18
    %v34 = vunpack.c.l.b16 %v19
    %v35 = vunpack.c.l.b16 %v20
    %v36 = vunpack.c.l.b16 %v21
    %v37 = vpack.c.b16 %v34, %v33
    %v38 = vpack.c.b16 %v36, %v35
    %vm41 = vcmask 261120
    %v43 = vsel %vm41, %v17, 0
    %45 = vmatprep.subr.bf16.mxu0 0
    %46 = vmatpush1.bf16.msra.mxu0 %v37
    %47 = vmatprep.subr.bf16.mxu0 0
    %48 = vmatpush1.bf16.msra.mxu0 %v38
    %49 = vmatprep.subr.bf16.mxu0 0
    %50 = vmatpush1.bf16.msra.mxu0 0
    %51 = vmatprep.subr.bf16.mxu0 0
    %52 = vmatpush1.bf16.msra.mxu0 0
    %53 = vmatprep.subr.bf16.mxu0 0
    %54 = vmatpush1.bf16.msra.mxu0 0
    %55 = vmatprep.subr.bf16.mxu0 0
    %56 = vmatpush1.bf16.msra.mxu0 0
    %57 = vmatprep.subr.bf16.mxu0 0
    %58 = vmatpush1.bf16.msra.mxu0 0
    %59 = vmatprep.subr.bf16.mxu0 0
    %60 = vmatpush1.bf16.msra.mxu0 0
    %61 = vmatprep.subr.bf16.mxu0 0
    %62 = vmatpush1.bf16.msra.mxu0 0
    %63 = vmatprep.subr.bf16.mxu0 0
    %64 = vmatpush1.bf16.msra.mxu0 0
    %65 = vmatprep.subr.bf16.mxu0 0
    %66 = vmatpush1.bf16.msra.mxu0 0
    %67 = vmatprep.subr.bf16.mxu0 0
    %68 = vmatpush1.bf16.msra.mxu0 0
    %69 = vmatprep.subr.bf16.mxu0 0
    %70 = vmatpush1.bf16.msra.mxu0 0
    %71 = vmatprep.subr.bf16.mxu0 0
    %72 = vmatpush1.bf16.msra.mxu0 0
    %73 = vmatprep.subr.bf16.mxu0 0
    %74 = vmatpush1.bf16.msra.mxu0 0
    %75 = vmatprep.subr.bf16.mxu0 0
    %76 = vmatpush1.bf16.msra.mxu0 0
    %77 = vmatprep.mubr.bf16.mxu0 0
    %78 = vmatmul.mubr.bf16.gmra.mrb[0].mxu0 %v43
    %v79 = vpop.f32.mrb[0].mxu0
    %v80 = vadd.f32 %v27, %v79
    %v81 = vpop.f32.mrb[0].mxu0
    %v82 = vpop.f32.mrb[0].mxu0
    %v83 = vpop.f32.mrb[0].mxu0
    %84 = vdwg.mxu0
    %vm85 = vcmask 171008
    %86 = vst.msk [vmem:[#allocation2] sm:$0xff] %vm85, %v80
    // Predicated region
    $region14: #{confnet_forward.1} parent=1 // pred_check
      _
    $region15: #{confnet_forward.1} parent=1 // pred_check_branch
      %88 = sbr.rel (0) target = $region17
    $region16: #{confnet_forward.1} parent=1 // pred_region
      %s90 = ssub.s32 128, 128
      %91 = vsyncadd [#allocation3], %s90
      %s93 = sshll.u32 [#allocation2], 4
      %s94 = int_to_ptr.vmem [resolvable:$true] %s93
      %96 = dma.vmem_to_hbm [thread:$0]  %s94, 128, %s3, [#allocation3]
    $region17: #{confnet_forward.1} parent=1 // pred_fallthru
      _
    // Predicated region
    $region18: #{confnet_forward.1} parent=1 // pred_check
      _
    $region19: #{confnet_forward.1} parent=1 // pred_check_branch
      %98 = sbr.rel (0) target = $region21
    $region20: #{confnet_forward.1} parent=1 // pred_region
      %99 = dma.done [#allocation3], 128
    $region21: #{confnet_forward.1} parent=1 // pred_fallthru
      _
    %100 = vsyncpa [#allocation3], 1

</llo_original>
